<compile_context>
chip_gen: v6e
topology: v6e:2x2x1
jax: 0.10.0
libtpu: 0.0.40
codegen_flags: <defaults>
</compile_context>

<pallas_src>
import functools

import jax
import jax.numpy as jnp
from jax import lax
from jax.experimental import pallas as pl
from jax.experimental.pallas import tpu as pltpu


def _conv_norm_relu_kernel(x_ref, w_ref, m_ref, g_ref, b_ref, o_ref, xp_ref,
                           *, W, taps, eps, neg_slope):
    """One batch-block per grid step.

    x_ref : (nb, Cin, H*W)        raw activations (compute dtype)
    w_ref : (KH*KW, Cout, Cin)    per-tap conv weights (compute dtype)
    m_ref : (KW, H*W)             0/1 column-validity masks per kw offset
    g_ref : (Cout, 1) f32         InstanceNorm gamma
    b_ref : (Cout, 1) f32         InstanceNorm beta
    o_ref : (nb, Cout, H*W) f32   output tile (lane-dense last dim)
    xp_ref: (Cin, H*W + 2*halo)   zero-haloed per-sample scratch (compute dtype)
    """
    nb, cin, hw = x_ref.shape
    cout = o_ref.shape[1]
    off = (xp_ref.shape[-1] - hw) // 2          # halo width of the scratch
    kw_n = m_ref.shape[0]
    inv_hw = 1.0 / hw

    # Zero the scratch (incl. halo) once per grid step; the interior is fully
    # overwritten for every sample, the halo stays zero.  (Done every step so
    # megacore grid sharding stays correct - each core owns its own scratch.)
    xp_ref[...] = jnp.zeros(xp_ref.shape, xp_ref.dtype)

    g = g_ref[...]                              # (Cout, 1)
    b = b_ref[...]

    for i in range(nb):                         # small static unroll over batch block
        # One copy of the raw sample into the interior of the zero-haloed scratch.
        xp_ref[:, pl.ds(off, hw)] = x_ref[i]

        # --- Conv2d (stride 1, 'same', no bias): KH*KW shifted MXU matmuls ---
        acc = jnp.zeros((cout, hw), jnp.float32)
        for t, (dh, dw) in enumerate(taps):
            start = off + dh * W + dw           # static lane offset
            xs = xp_ref[:, pl.ds(start, hw)]    # (Cin, H*W) shifted view
            if dw != 0:
                # zero the output columns whose source wrapped across the
                # W boundary (row-to-row wrap of the flattened layout)
                kw_i = dw + kw_n // 2
                xs = xs * m_ref[kw_i:kw_i + 1, :]
            acc = acc + jnp.dot(w_ref[t], xs,
                                preferred_element_type=jnp.float32)

        # --- InstanceNorm2d (biased var, two-pass for accuracy) ---
        mean = jnp.sum(acc, axis=-1, keepdims=True) * inv_hw
        cen = acc - mean
        var = jnp.sum(cen * cen, axis=-1, keepdims=True) * inv_hw
        y = cen * lax.rsqrt(var + eps)
        y = y * g + b

        # TODO(synk): dropout_op is None in this configuration (and Dropout is
        # identity at inference), so nothing is emitted for it.

        # --- LeakyReLU (valid for 0 <= neg_slope < 1) ---
        y = jnp.maximum(y, neg_slope * y)

        o_ref[i] = y.astype(o_ref.dtype)


def _r(x, m):
    return (x + m - 1) // m * m


def _vmem_capacity_bytes():
    """Physical VMEM per TensorCore; conservative fallback (v7x = 64 MiB)."""
    try:
        info = pltpu.get_tpu_info()
        cap = getattr(info, "vmem_capacity_bytes", None)
        if cap:
            return int(cap)
    except Exception:
        pass
    return 64 << 20


def _pick_batch_block(n, per_sample_bytes, budget, max_nb=4):
    """Largest batch block fitting the VMEM budget that divides N; keep >=2
    grid steps when possible so both v7x TensorCores get work (costs only one
    extra ~0.35us pipeline step on single-TC v5e/v6e)."""
    nb = int(max(1, min(n, max_nb, budget // max(1, per_sample_bytes))))
    while n % nb:
        nb -= 1
    if n >= 2 and n // nb < 2:
        nb = max(1, n // 2)
        while n % nb:
            nb -= 1
    return max(1, nb)


def conv_dropout_norm_relu(x_nchw, w_oihw, gamma, beta, *, eps=1e-5,
                           neg_slope=0.01, mxu_bf16=True, batch_block=None):
    """Forward pass of ConvDropoutNormReLU (conv -> InstanceNorm -> LeakyReLU).

    x_nchw : (N, Cin, H, W) float32
    w_oihw : (Cout, Cin, KH, KW) float32
    gamma, beta : (Cout,) float32
    returns (N, Cout, H, W) float32
    """
    N, Cin, H, W = x_nchw.shape
    Cout, Cin2, KH, KW = w_oihw.shape
    assert Cin2 == Cin
    assert KH % 2 == 1 and KW % 2 == 1, "odd kernel sizes only"
    # TODO(synk): stride is 1 in this configuration; strided conv not implemented.

    HW = H * W
    off = (KH // 2) * W + (KW // 2)             # halo of the flattened scratch
    P = HW + 2 * off

    cdt = jnp.bfloat16 if mxu_bf16 else jnp.float32

    # Raw activations, flattened spatially (free reshape; no im2col in HBM).
    x_flat = x_nchw.reshape(N, Cin, HW).astype(cdt)

    # Per-tap weights (KH*KW, Cout, Cin), tap order (kh, kw).
    w_taps = jnp.transpose(w_oihw, (2, 3, 0, 1)).reshape(KH * KW, Cout, Cin)
    w_taps = w_taps.astype(cdt)
    taps = tuple((kh - KH // 2, kw - KW // 2)
                 for kh in range(KH) for kw in range(KW))

    # 0/1 column-validity masks: row kw zeroes output columns whose source
    # column (w + kw - KW//2) falls outside [0, W).
    col = jnp.arange(HW, dtype=jnp.int32) % W
    mask_rows = []
    for kw in range(KW):
        dw = kw - KW // 2
        valid = jnp.logical_and(col + dw >= 0, col + dw <= W - 1)
        mask_rows.append(valid.astype(cdt))
    masks = jnp.stack(mask_rows, axis=0)                    # (KW, HW)

    g2 = gamma.reshape(Cout, 1).astype(jnp.float32)
    b2 = beta.reshape(Cout, 1).astype(jnp.float32)

    # --- generation-aware VMEM budgeting -------------------------------------
    isz = jnp.dtype(cdt).itemsize
    in_blk = _r(Cin, 8) * _r(P, 128) * isz                  # per-sample input block
    out_blk = _r(Cout, 8) * _r(HW, 128) * 4                 # per-sample output block
    fixed = (KH * KW * _r(Cout, 8) * _r(Cin, 128) * isz     # weights
             + _r(KW, 8) * _r(HW, 128) * isz                # masks
             + 2 * _r(Cout, 8) * 128 * 4                    # gamma, beta
             + _r(Cin, 8) * _r(P, 128) * isz)               # padded scratch
    fixed_db = 2 * fixed                                    # small blocks double-buffered too
    vmem_cap = _vmem_capacity_bytes()
    budget = max(1 << 20, vmem_cap // 2 - fixed_db)

    if batch_block is None:
        batch_block = _pick_batch_block(N, 2 * (in_blk + out_blk), budget)
    nb = batch_block
    assert N % nb == 0, (N, nb)
    # TODO(synk): for extreme H*W where even nb=1 exceeds the budget, a spatial
    # (HW) grid axis with running-sum InstanceNorm would be needed.

    need = 2 * nb * (in_blk + out_blk) + fixed_db + (4 << 20)
    vmem_limit = int(min(int(vmem_cap * 0.85), max(32 << 20, need)))

    kernel = functools.partial(_conv_norm_relu_kernel, W=W, taps=taps,
                               eps=eps, neg_slope=neg_slope)

    out = pl.pallas_call(
        kernel,
        out_shape=jax.ShapeDtypeStruct((N, Cout, HW), jnp.float32),
        grid_spec=pltpu.PrefetchScalarGridSpec(
            num_scalar_prefetch=0,
            grid=(N // nb,),
            in_specs=[
                pl.BlockSpec((nb, Cin, HW), lambda n: (n, 0, 0)),
                pl.BlockSpec((KH * KW, Cout, Cin), lambda n: (0, 0, 0)),
                pl.BlockSpec((KW, HW), lambda n: (0, 0)),
                pl.BlockSpec((Cout, 1), lambda n: (0, 0)),
                pl.BlockSpec((Cout, 1), lambda n: (0, 0)),
            ],
            out_specs=pl.BlockSpec((nb, Cout, HW), lambda n: (n, 0, 0)),
            scratch_shapes=[pltpu.VMEM((Cin, P), cdt)],
        ),
        compiler_params=pltpu.CompilerParams(
            dimension_semantics=("parallel",),
            vmem_limit_bytes=vmem_limit,
        ),
    )(x_flat, w_taps, masks, g2, b2)

    # (N, Cout, H*W) -> (N, Cout, H, W): free reshape (no transpose pass).
    return out.reshape(N, Cout, H, W)


def _reference(x_nchw, w_oihw, gamma, beta, *, eps=1e-5, neg_slope=0.01):
    """Pure-JAX reference mirroring PyTorch semantics."""
    y = lax.conv_general_dilated(
        x_nchw, w_oihw, window_strides=(1, 1), padding="SAME",
        dimension_numbers=("NCHW", "OIHW", "NCHW"))
    mean = jnp.mean(y, axis=(2, 3), keepdims=True)
    var = jnp.mean((y - mean) ** 2, axis=(2, 3), keepdims=True)
    y = (y - mean) * lax.rsqrt(var + eps)
    y = y * gamma.reshape(1, -1, 1, 1) + beta.reshape(1, -1, 1, 1)
    return jnp.where(y >= 0.0, y, neg_slope * y)


if __name__ == "__main__":
    # Small shapes consistent with the module: Conv2d(4 -> 8, k=3, s=1, pad=1)
    N, Cin, Cout, H, W = 2, 4, 8, 16, 16
    KH = KW = 3

    key = jax.random.PRNGKey(0)
    kx, kw, kg, kb = jax.random.split(key, 4)
    x = jax.random.normal(kx, (N, Cin, H, W), jnp.float32)
    w = jax.random.normal(kw, (Cout, Cin, KH, KW), jnp.float32) * 0.1
    gamma = 1.0 + 0.05 * jax.random.normal(kg, (Cout,), jnp.float32)
    beta = 0.05 * jax.random.normal(kb, (Cout,), jnp.float32)

    ref = _reference(x, w, gamma, beta)

    # f32-MXU path: bit-faithful semantics of the original module.
    out_f32 = conv_dropout_norm_relu(x, w, gamma, beta, mxu_bf16=False)
    out_f32 = jax.block_until_ready(out_f32)
    assert out_f32.shape == (N, Cout, H, W), out_f32.shape
    err_f32 = float(jnp.max(jnp.abs(out_f32 - ref)))
    assert err_f32 < 1e-3, err_f32

    # bf16-MXU fast path (recommended on v6e/v7x): f32 accumulation, small tol.
    out_bf16 = conv_dropout_norm_relu(x, w, gamma, beta, mxu_bf16=True)
    out_bf16 = jax.block_until_ready(out_bf16)
    err_bf16 = float(jnp.max(jnp.abs(out_bf16 - ref)))
    assert err_bf16 < 5e-2, err_bf16

    print("KERNEL_OK")
</pallas_src>

<mosaic_0001>
module attributes {stable_mosaic.version = 11 : i64} {
  func.func @_conv_norm_relu_kernel(%arg0: i32, %arg1: memref<1x4x256xf32, #tpu.memory_space<vmem>>, %arg2: memref<9x8x4xf32, #tpu.memory_space<vmem>>, %arg3: memref<3x256xf32, #tpu.memory_space<vmem>>, %arg4: memref<8x1xf32, #tpu.memory_space<vmem>>, %arg5: memref<8x1xf32, #tpu.memory_space<vmem>>, %arg6: memref<1x8x256xf32, #tpu.memory_space<vmem>>, %arg7: memref<4x290xf32, #tpu.memory_space<vmem>>) attributes {dimension_semantics = [#tpu.dimension_semantics<parallel>], iteration_bounds = array<i64: 2>, scalar_prefetch = 0 : i64, scratch_operands = 1 : i64, tpu.core_type = #tpu.core_type<tc>, window_params = [{transform_indices = @transform_0, window_bounds = array<i64: 1, 4, 256>}, {pipeline_mode = #tpu.pipeline_mode<synchronous>, transform_indices = @transform_1, window_bounds = array<i64: 9, 8, 4>}, {pipeline_mode = #tpu.pipeline_mode<synchronous>, transform_indices = @transform_2, window_bounds = array<i64: 3, 256>}, {pipeline_mode = #tpu.pipeline_mode<synchronous>, transform_indices = @transform_3, window_bounds = array<i64: 8, 1>}, {pipeline_mode = #tpu.pipeline_mode<synchronous>, transform_indices = @transform_4, window_bounds = array<i64: 8, 1>}, {transform_indices = @transform_5, window_bounds = array<i64: 1, 8, 256>}]} {
    %cst = arith.constant 0.000000e+00 : f32
    %0 = vector.broadcast %cst : f32 to vector<4x290xf32>
    %c0 = arith.constant 0 : index
    %c0_0 = arith.constant 0 : index
    %1 = vector.load %arg7[%c0, %c0_0] : memref<4x290xf32, #tpu.memory_space<vmem>>, vector<4x290xf32>
    tpu.vector_store %arg7[%c0, %c0_0], %0 {strides = array<i32>} : memref<4x290xf32, #tpu.memory_space<vmem>>, vector<4x290xf32>,
    %c0_1 = arith.constant 0 : index
    %c0_2 = arith.constant 0 : index
    %2 = vector.load %arg4[%c0_1, %c0_2] : memref<8x1xf32, #tpu.memory_space<vmem>>, vector<8x1xf32>
    %c0_3 = arith.constant 0 : index
    %c0_4 = arith.constant 0 : index
    %3 = vector.load %arg5[%c0_3, %c0_4] : memref<8x1xf32, #tpu.memory_space<vmem>>, vector<8x1xf32>
    %c0_5 = arith.constant 0 : index
    %c0_6 = arith.constant 0 : index
    %c0_7 = arith.constant 0 : index
    %4 = vector.load %arg1[%c0_5, %c0_6, %c0_7] : memref<1x4x256xf32, #tpu.memory_space<vmem>>, vector<1x4x256xf32>
    %5 = vector.shape_cast %4 : vector<1x4x256xf32> to vector<4x256xf32>
    %c0_8 = arith.constant 0 : index
    %c17 = arith.constant 17 : index
    %6 = vector.load %arg7[%c0_8, %c17] : memref<4x290xf32, #tpu.memory_space<vmem>>, vector<4x256xf32>
    tpu.vector_store %arg7[%c0_8, %c17], %5 {strides = array<i32>} : memref<4x290xf32, #tpu.memory_space<vmem>>, vector<4x256xf32>,
    %cst_9 = arith.constant 0.000000e+00 : f32
    %7 = vector.broadcast %cst_9 : f32 to vector<8x256xf32>
    %c0_10 = arith.constant 0 : index
    %c0_11 = arith.constant 0 : index
    %8 = vector.load %arg7[%c0_10, %c0_11] : memref<4x290xf32, #tpu.memory_space<vmem>>, vector<4x256xf32>
    %c0_12 = arith.constant 0 : index
    %c0_13 = arith.constant 0 : index
    %9 = vector.load %arg3[%c0_12, %c0_13] : memref<3x256xf32, #tpu.memory_space<vmem>>, vector<1x256xf32>
    %10 = vector.broadcast %9 : vector<1x256xf32> to vector<4x256xf32>
    %11 = arith.mulf %8, %10 : vector<4x256xf32>
    %c0_14 = arith.constant 0 : index
    %c0_15 = arith.constant 0 : index
    %c0_16 = arith.constant 0 : index
    %12 = vector.load %arg2[%c0_14, %c0_15, %c0_16] : memref<9x8x4xf32, #tpu.memory_space<vmem>>, vector<1x8x4xf32>
    %13 = vector.shape_cast %12 : vector<1x8x4xf32> to vector<8x4xf32>
    %cst_17 = arith.constant dense<0.000000e+00> : vector<8x256xf32>
    %14 = tpu.matmul %13, %11, %cst_17 {dimension_numbers = #tpu.dot_dimension_numbers<[1], [0], [0], [1], [0, 0, 1, 1], [], []>} : vector<8x4xf32>, vector<4x256xf32>, vector<8x256xf32> -> vector<8x256xf32>
    %15 = arith.addf %7, %14 : vector<8x256xf32>
    %c0_18 = arith.constant 0 : index
    %c1 = arith.constant 1 : index
    %16 = vector.load %arg7[%c0_18, %c1] : memref<4x290xf32, #tpu.memory_space<vmem>>, vector<4x256xf32>
    %c1_19 = arith.constant 1 : index
    %c0_20 = arith.constant 0 : index
    %c0_21 = arith.constant 0 : index
    %17 = vector.load %arg2[%c1_19, %c0_20, %c0_21] : memref<9x8x4xf32, #tpu.memory_space<vmem>>, vector<1x8x4xf32>
    %18 = vector.shape_cast %17 : vector<1x8x4xf32> to vector<8x4xf32>
    %cst_22 = arith.constant dense<0.000000e+00> : vector<8x256xf32>
    %19 = tpu.matmul %18, %16, %cst_22 {dimension_numbers = #tpu.dot_dimension_numbers<[1], [0], [0], [1], [0, 0, 1, 1], [], []>} : vector<8x4xf32>, vector<4x256xf32>, vector<8x256xf32> -> vector<8x256xf32>
    %20 = arith.addf %15, %19 : vector<8x256xf32>
    %c0_23 = arith.constant 0 : index
    %c2 = arith.constant 2 : index
    %21 = vector.load %arg7[%c0_23, %c2] : memref<4x290xf32, #tpu.memory_space<vmem>>, vector<4x256xf32>
    %c2_24 = arith.constant 2 : index
    %c0_25 = arith.constant 0 : index
    %22 = vector.load %arg3[%c2_24, %c0_25] : memref<3x256xf32, #tpu.memory_space<vmem>>, vector<1x256xf32>
    %23 = vector.broadcast %22 : vector<1x256xf32> to vector<4x256xf32>
    %24 = arith.mulf %21, %23 : vector<4x256xf32>
    %c2_26 = arith.constant 2 : index
    %c0_27 = arith.constant 0 : index
    %c0_28 = arith.constant 0 : index
    %25 = vector.load %arg2[%c2_26, %c0_27, %c0_28] : memref<9x8x4xf32, #tpu.memory_space<vmem>>, vector<1x8x4xf32>
    %26 = vector.shape_cast %25 : vector<1x8x4xf32> to vector<8x4xf32>
    %cst_29 = arith.constant dense<0.000000e+00> : vector<8x256xf32>
    %27 = tpu.matmul %26, %24, %cst_29 {dimension_numbers = #tpu.dot_dimension_numbers<[1], [0], [0], [1], [0, 0, 1, 1], [], []>} : vector<8x4xf32>, vector<4x256xf32>, vector<8x256xf32> -> vector<8x256xf32>
    %28 = arith.addf %20, %27 : vector<8x256xf32>
    %c0_30 = arith.constant 0 : index
    %c16 = arith.constant 16 : index
    %29 = vector.load %arg7[%c0_30, %c16] : memref<4x290xf32, #tpu.memory_space<vmem>>, vector<4x256xf32>
    %c0_31 = arith.constant 0 : index
    %c0_32 = arith.constant 0 : index
    %30 = vector.load %arg3[%c0_31, %c0_32] : memref<3x256xf32, #tpu.memory_space<vmem>>, vector<1x256xf32>
    %31 = vector.broadcast %30 : vector<1x256xf32> to vector<4x256xf32>
    %32 = arith.mulf %29, %31 : vector<4x256xf32>
    %c3 = arith.constant 3 : index
    %c0_33 = arith.constant 0 : index
    %c0_34 = arith.constant 0 : index
    %33 = vector.load %arg2[%c3, %c0_33, %c0_34] : memref<9x8x4xf32, #tpu.memory_space<vmem>>, vector<1x8x4xf32>
    %34 = vector.shape_cast %33 : vector<1x8x4xf32> to vector<8x4xf32>
    %cst_35 = arith.constant dense<0.000000e+00> : vector<8x256xf32>
    %35 = tpu.matmul %34, %32, %cst_35 {dimension_numbers = #tpu.dot_dimension_numbers<[1], [0], [0], [1], [0, 0, 1, 1], [], []>} : vector<8x4xf32>, vector<4x256xf32>, vector<8x256xf32> -> vector<8x256xf32>
    %36 = arith.addf %28, %35 : vector<8x256xf32>
    %c0_36 = arith.constant 0 : index
    %c17_37 = arith.constant 17 : index
    %37 = vector.load %arg7[%c0_36, %c17_37] : memref<4x290xf32, #tpu.memory_space<vmem>>, vector<4x256xf32>
    %c4 = arith.constant 4 : index
    %c0_38 = arith.constant 0 : index
    %c0_39 = arith.constant 0 : index
    %38 = vector.load %arg2[%c4, %c0_38, %c0_39] : memref<9x8x4xf32, #tpu.memory_space<vmem>>, vector<1x8x4xf32>
    %39 = vector.shape_cast %38 : vector<1x8x4xf32> to vector<8x4xf32>
    %cst_40 = arith.constant dense<0.000000e+00> : vector<8x256xf32>
    %40 = tpu.matmul %39, %37, %cst_40 {dimension_numbers = #tpu.dot_dimension_numbers<[1], [0], [0], [1], [0, 0, 1, 1], [], []>} : vector<8x4xf32>, vector<4x256xf32>, vector<8x256xf32> -> vector<8x256xf32>
    %41 = arith.addf %36, %40 : vector<8x256xf32>
    %c0_41 = arith.constant 0 : index
    %c18 = arith.constant 18 : index
    %42 = vector.load %arg7[%c0_41, %c18] : memref<4x290xf32, #tpu.memory_space<vmem>>, vector<4x256xf32>
    %c2_42 = arith.constant 2 : index
    %c0_43 = arith.constant 0 : index
    %43 = vector.load %arg3[%c2_42, %c0_43] : memref<3x256xf32, #tpu.memory_space<vmem>>, vector<1x256xf32>
    %44 = vector.broadcast %43 : vector<1x256xf32> to vector<4x256xf32>
    %45 = arith.mulf %42, %44 : vector<4x256xf32>
    %c5 = arith.constant 5 : index
    %c0_44 = arith.constant 0 : index
    %c0_45 = arith.constant 0 : index
    %46 = vector.load %arg2[%c5, %c0_44, %c0_45] : memref<9x8x4xf32, #tpu.memory_space<vmem>>, vector<1x8x4xf32>
    %47 = vector.shape_cast %46 : vector<1x8x4xf32> to vector<8x4xf32>
    %cst_46 = arith.constant dense<0.000000e+00> : vector<8x256xf32>
    %48 = tpu.matmul %47, %45, %cst_46 {dimension_numbers = #tpu.dot_dimension_numbers<[1], [0], [0], [1], [0, 0, 1, 1], [], []>} : vector<8x4xf32>, vector<4x256xf32>, vector<8x256xf32> -> vector<8x256xf32>
    %49 = arith.addf %41, %48 : vector<8x256xf32>
    %c0_47 = arith.constant 0 : index
    %c32 = arith.constant 32 : index
    %50 = vector.load %arg7[%c0_47, %c32] : memref<4x290xf32, #tpu.memory_space<vmem>>, vector<4x256xf32>
    %c0_48 = arith.constant 0 : index
    %c0_49 = arith.constant 0 : index
    %51 = vector.load %arg3[%c0_48, %c0_49] : memref<3x256xf32, #tpu.memory_space<vmem>>, vector<1x256xf32>
    %52 = vector.broadcast %51 : vector<1x256xf32> to vector<4x256xf32>
    %53 = arith.mulf %50, %52 : vector<4x256xf32>
    %c6 = arith.constant 6 : index
    %c0_50 = arith.constant 0 : index
    %c0_51 = arith.constant 0 : index
    %54 = vector.load %arg2[%c6, %c0_50, %c0_51] : memref<9x8x4xf32, #tpu.memory_space<vmem>>, vector<1x8x4xf32>
    %55 = vector.shape_cast %54 : vector<1x8x4xf32> to vector<8x4xf32>
    %cst_52 = arith.constant dense<0.000000e+00> : vector<8x256xf32>
    %56 = tpu.matmul %55, %53, %cst_52 {dimension_numbers = #tpu.dot_dimension_numbers<[1], [0], [0], [1], [0, 0, 1, 1], [], []>} : vector<8x4xf32>, vector<4x256xf32>, vector<8x256xf32> -> vector<8x256xf32>
    %57 = arith.addf %49, %56 : vector<8x256xf32>
    %c0_53 = arith.constant 0 : index
    %c33 = arith.constant 33 : index
    %58 = vector.load %arg7[%c0_53, %c33] : memref<4x290xf32, #tpu.memory_space<vmem>>, vector<4x256xf32>
    %c7 = arith.constant 7 : index
    %c0_54 = arith.constant 0 : index
    %c0_55 = arith.constant 0 : index
    %59 = vector.load %arg2[%c7, %c0_54, %c0_55] : memref<9x8x4xf32, #tpu.memory_space<vmem>>, vector<1x8x4xf32>
    %60 = vector.shape_cast %59 : vector<1x8x4xf32> to vector<8x4xf32>
    %cst_56 = arith.constant dense<0.000000e+00> : vector<8x256xf32>
    %61 = tpu.matmul %60, %58, %cst_56 {dimension_numbers = #tpu.dot_dimension_numbers<[1], [0], [0], [1], [0, 0, 1, 1], [], []>} : vector<8x4xf32>, vector<4x256xf32>, vector<8x256xf32> -> vector<8x256xf32>
    %62 = arith.addf %57, %61 : vector<8x256xf32>
    %c0_57 = arith.constant 0 : index
    %c34 = arith.constant 34 : index
    %63 = vector.load %arg7[%c0_57, %c34] : memref<4x290xf32, #tpu.memory_space<vmem>>, vector<4x256xf32>
    %c2_58 = arith.constant 2 : index
    %c0_59 = arith.constant 0 : index
    %64 = vector.load %arg3[%c2_58, %c0_59] : memref<3x256xf32, #tpu.memory_space<vmem>>, vector<1x256xf32>
    %65 = vector.broadcast %64 : vector<1x256xf32> to vector<4x256xf32>
    %66 = arith.mulf %63, %65 : vector<4x256xf32>
    %c8 = arith.constant 8 : index
    %c0_60 = arith.constant 0 : index
    %c0_61 = arith.constant 0 : index
    %67 = vector.load %arg2[%c8, %c0_60, %c0_61] : memref<9x8x4xf32, #tpu.memory_space<vmem>>, vector<1x8x4xf32>
    %68 = vector.shape_cast %67 : vector<1x8x4xf32> to vector<8x4xf32>
    %cst_62 = arith.constant dense<0.000000e+00> : vector<8x256xf32>
    %69 = tpu.matmul %68, %66, %cst_62 {dimension_numbers = #tpu.dot_dimension_numbers<[1], [0], [0], [1], [0, 0, 1, 1], [], []>} : vector<8x4xf32>, vector<4x256xf32>, vector<8x256xf32> -> vector<8x256xf32>
    %70 = arith.addf %62, %69 : vector<8x256xf32>
    %cst_63 = arith.constant dense<0.000000e+00> : vector<8xf32>
    %71 = vector.multi_reduction <add>, %70, %cst_63 [1] : vector<8x256xf32> to vector<8xf32>
    %72 = vector.shape_cast %71 : vector<8xf32> to vector<8x1xf32>
    %cst_64 = arith.constant 3.906250e-03 : f32
    %73 = vector.broadcast %cst_64 : f32 to vector<8x1xf32>
    %74 = arith.mulf %72, %73 : vector<8x1xf32>
    %75 = vector.broadcast %74 : vector<8x1xf32> to vector<8x256xf32>
    %76 = arith.subf %70, %75 : vector<8x256xf32>
    %77 = arith.mulf %76, %76 : vector<8x256xf32>
    %cst_65 = arith.constant dense<0.000000e+00> : vector<8xf32>
    %78 = vector.multi_reduction <add>, %77, %cst_65 [1] : vector<8x256xf32> to vector<8xf32>
    %79 = vector.shape_cast %78 : vector<8xf32> to vector<8x1xf32>
    %cst_66 = arith.constant 3.906250e-03 : f32
    %80 = vector.broadcast %cst_66 : f32 to vector<8x1xf32>
    %81 = arith.mulf %79, %80 : vector<8x1xf32>
    %cst_67 = arith.constant 9.99999974E-6 : f32
    %82 = vector.broadcast %cst_67 : f32 to vector<8x1xf32>
    %83 = arith.addf %81, %82 : vector<8x1xf32>
    %84 = math.rsqrt %83 : vector<8x1xf32>
    %85 = vector.broadcast %84 : vector<8x1xf32> to vector<8x256xf32>
    %86 = arith.mulf %76, %85 : vector<8x256xf32>
    %87 = vector.broadcast %2 : vector<8x1xf32> to vector<8x256xf32>
    %88 = arith.mulf %86, %87 : vector<8x256xf32>
    %89 = vector.broadcast %3 : vector<8x1xf32> to vector<8x256xf32>
    %90 = arith.addf %88, %89 : vector<8x256xf32>
    %cst_68 = arith.constant 0.00999999977 : f32
    %91 = vector.broadcast %cst_68 : f32 to vector<8x256xf32>
    %92 = arith.mulf %91, %90 : vector<8x256xf32>
    %93 = arith.maximumf %90, %92 : vector<8x256xf32>
    %c0_69 = arith.constant 0 : index
    %c0_70 = arith.constant 0 : index
    %c0_71 = arith.constant 0 : index
    %94 = vector.load %arg6[%c0_69, %c0_70, %c0_71] : memref<1x8x256xf32, #tpu.memory_space<vmem>>, vector<1x8x256xf32>
    %95 = vector.shape_cast %94 : vector<1x8x256xf32> to vector<8x256xf32>
    %96 = vector.shape_cast %93 : vector<8x256xf32> to vector<1x8x256xf32>
    tpu.vector_store %arg6[%c0_69, %c0_70, %c0_71], %96 {strides = array<i32>} : memref<1x8x256xf32, #tpu.memory_space<vmem>>, vector<1x8x256xf32>,
    return
  }
  func.func @transform_0(%arg0: i32) -> (i32, i32, i32) {
    %c0_i32 = arith.constant 0 : i32
    %c0_i32_0 = arith.constant 0 : i32
    %c0_i32_1 = arith.constant 0 : i32
    return %arg0, %c0_i32, %c0_i32_0 : i32, i32, i32
  }
  func.func @transform_1(%arg0: i32) -> (i32, i32, i32) {
    %c0_i32 = arith.constant 0 : i32
    %c0_i32_0 = arith.constant 0 : i32
    %c0_i32_1 = arith.constant 0 : i32
    %c0_i32_2 = arith.constant 0 : i32
    return %c0_i32, %c0_i32_0, %c0_i32_1 : i32, i32, i32
  }
  func.func @transform_2(%arg0: i32) -> (i32, i32) {
    %c0_i32 = arith.constant 0 : i32
    %c0_i32_0 = arith.constant 0 : i32
    %c0_i32_1 = arith.constant 0 : i32
    return %c0_i32, %c0_i32_0 : i32, i32
  }
  func.func @transform_3(%arg0: i32) -> (i32, i32) {
    %c0_i32 = arith.constant 0 : i32
    %c0_i32_0 = arith.constant 0 : i32
    %c0_i32_1 = arith.constant 0 : i32
    return %c0_i32, %c0_i32_0 : i32, i32
  }
  func.func @transform_4(%arg0: i32) -> (i32, i32) {
    %c0_i32 = arith.constant 0 : i32
    %c0_i32_0 = arith.constant 0 : i32
    %c0_i32_1 = arith.constant 0 : i32
    return %c0_i32, %c0_i32_0 : i32, i32
  }
  func.func @transform_5(%arg0: i32) -> (i32, i32, i32) {
    %c0_i32 = arith.constant 0 : i32
    %c0_i32_0 = arith.constant 0 : i32
    %c0_i32_1 = arith.constant 0 : i32
    return %arg0, %c0_i32, %c0_i32_0 : i32, i32, i32
  }
}

</mosaic_0001>

<llo_original>
// kernel: tpu_custom_call.1
$region0: #{tpu_custom_call.1}
  #allocation0 [shape = 'u32[]', space=smem, size = 0x4, offset = 0x4, fixed_abs, tag = 'smem constant byte address 0x4 - core index']
  #allocation1 [shape = 'u32[144,128]{1,0:T(1,128)}', space=vmem, size = 0x12000, scoped, tag = 'internal scratch']
  #allocation2 [shape = 'f32[4,290]{1,0:T(4,128)}', space=vmem, size = 0x1800, scoped, tag = 'scratch operand']
  %s0 = inlined_call_operand.vmem [shape: f32[2,4,256], index: 0, kind: input, shape index: {}]
  %s1 = inlined_call_operand.vmem [shape: f32[9,8,4], index: 1, kind: input, shape index: {}]
  %s2 = inlined_call_operand.vmem [shape: f32[3,256], index: 2, kind: input, shape index: {}]
  %s3 = inlined_call_operand.vmem [shape: f32[8,1], index: 3, kind: input, shape index: {}]
  %s4 = inlined_call_operand.vmem [shape: f32[8,1], index: 4, kind: input, shape index: {}]
  %s5 = inlined_call_operand.hbm [shape: f32[2,8,256], index: 5, kind: output, shape index: {}]
  %s6 = sld [smem:[#allocation0]]
  $region53: #{tpu_custom_call.1} parent=0
    _
  %s8 = ssub.s32 1, %s6
  %s9 = scalar_select 0, %s8, %s6
  $region1: #{tpu_custom_call.1} parent=0
    #allocation3 [shape = 'u8[16384]{0}', space=vmem, size = 0x4000, scoped, tag = 'output window, operand 0']
    #allocation4 [shape = 's32[2]{0}', space=sflag, size = 0x8, scoped, tag = 'scoped memory for tpu_custom_call.1']
    %10 = vsyncpa [#allocation4], 0
    %s11 = scalar_lea.sflag [#allocation4], 1
    %12 = vsyncpa %s11, 0
    loop: start=0, step=1, limit=4
    $region2: #{tpu_custom_call.1} parent=1 // loop_pre_header
      _
    $region3: #{tpu_custom_call.1} parent=1 // loop_header
      %s14 = sphi 0, %s18
      %p15 = scmp.ge.s32.totalorder %s14, 4
      %s24 = sphi 0, %s26
      %s27 = sphi 0, %s24
      %s28 = sphi 0, %s27
      %s44 = sphi 0, %s28
      %s48 = sphi 0, %s48
      %s50 = sphi 0, %s48
      %s51 = sphi 0, %s50
      %s65 = sphi 0, %s51
      %s69 = sphi 0, %s69
      %s71 = sphi 0, %s69
      %s72 = sphi 0, %s71
      %s86 = sphi 0, %s72
      %s90 = sphi 0, %s90
      %s92 = sphi 0, %s90
      %s93 = sphi 0, %s92
      %s107 = sphi 0, %s93
      %s111 = sphi 0, %s111
      %s113 = sphi 0, %s111
      %s114 = sphi 0, %s113
      %s128 = sphi 0, %s114
      %s134 = sphi 0, %s136
      %s137 = sphi 0, %s134
      %s138 = sphi 0, %s137
      %s154 = sphi 0, %s138
    $region4: #{tpu_custom_call.1} parent=1 // loop_header_branch
      %17 = sbr.rel (%p15) target = $region8
    $region5: #{tpu_custom_call.1} parent=1 // loop_body
      %s19 = ssub.s32 %s14, 1
      %s20 = ssub.s32 %s14, 2
      %s21 = sadd.s32 %s14, 1
      %s22 = ssub.s32 %s14, %s21
      %p23 = scmp.eq.s32.totalorder %s22, 0
      %s25 = sadd.s32 %s24, 1
      %s26 = scalar_select %p23, %s24, %s25
      %p29 = pneg %p23
      %p30 = scmp.eq.s32.totalorder %s14, 1
      %p31 = por %p29, %p30
      %p32 = scmp.ne.s32.totalorder %s24, %s27
      %p33 = scmp.eq.s32.totalorder %s14, 0
      %p34 = por %p32, %p33
      %p35 = scmp.ne.s32.totalorder %s24, %s27
      %p36 = scmp.eq.s32.totalorder %s19, 1
      %p37 = por %p35, %p36
      %p38 = scmp.ne.s32.totalorder %s27, %s28
      %p39 = scmp.eq.s32.totalorder %s19, 0
      %p40 = por %p38, %p39
      %p41 = scmp.ne.s32.totalorder %s27, %s28
      %p42 = scmp.eq.s32.totalorder %s20, 1
      %p43 = por %p41, %p42
      %p45 = scmp.ne.s32.totalorder %s28, %s44
      %p46 = scmp.eq.s32.totalorder %s20, 0
      %p47 = por %p45, %p46
      %s49 = sadd.s32 %s48, 1
      %p52 = scmp.eq.s32.totalorder %s14, 1
      %p53 = scmp.ne.s32.totalorder %s48, %s50
      %p54 = scmp.eq.s32.totalorder %s14, 0
      %p55 = por %p53, %p54
      %p56 = scmp.ne.s32.totalorder %s48, %s50
      %p57 = scmp.eq.s32.totalorder %s19, 1
      %p58 = por %p56, %p57
      %p59 = scmp.ne.s32.totalorder %s50, %s51
      %p60 = scmp.eq.s32.totalorder %s19, 0
      %p61 = por %p59, %p60
      %p62 = scmp.ne.s32.totalorder %s50, %s51
      %p63 = scmp.eq.s32.totalorder %s20, 1
      %p64 = por %p62, %p63
      %p66 = scmp.ne.s32.totalorder %s51, %s65
      %p67 = scmp.eq.s32.totalorder %s20, 0
      %p68 = por %p66, %p67
      %s70 = sadd.s32 %s69, 1
      %p73 = scmp.eq.s32.totalorder %s14, 1
      %p74 = scmp.ne.s32.totalorder %s69, %s71
      %p75 = scmp.eq.s32.totalorder %s14, 0
      %p76 = por %p74, %p75
      %p77 = scmp.ne.s32.totalorder %s69, %s71
      %p78 = scmp.eq.s32.totalorder %s19, 1
      %p79 = por %p77, %p78
      %p80 = scmp.ne.s32.totalorder %s71, %s72
      %p81 = scmp.eq.s32.totalorder %s19, 0
      %p82 = por %p80, %p81
      %p83 = scmp.ne.s32.totalorder %s71, %s72
      %p84 = scmp.eq.s32.totalorder %s20, 1
      %p85 = por %p83, %p84
      %p87 = scmp.ne.s32.totalorder %s72, %s86
      %p88 = scmp.eq.s32.totalorder %s20, 0
      %p89 = por %p87, %p88
      %s91 = sadd.s32 %s90, 1
      %p94 = scmp.eq.s32.totalorder %s14, 1
      %p95 = scmp.ne.s32.totalorder %s90, %s92
      %p96 = scmp.eq.s32.totalorder %s14, 0
      %p97 = por %p95, %p96
      %p98 = scmp.ne.s32.totalorder %s90, %s92
      %p99 = scmp.eq.s32.totalorder %s19, 1
      %p100 = por %p98, %p99
      %p101 = scmp.ne.s32.totalorder %s92, %s93
      %p102 = scmp.eq.s32.totalorder %s19, 0
      %p103 = por %p101, %p102
      %p104 = scmp.ne.s32.totalorder %s92, %s93
      %p105 = scmp.eq.s32.totalorder %s20, 1
      %p106 = por %p104, %p105
      %p108 = scmp.ne.s32.totalorder %s93, %s107
      %p109 = scmp.eq.s32.totalorder %s20, 0
      %p110 = por %p108, %p109
      %s112 = sadd.s32 %s111, 1
      %p115 = scmp.eq.s32.totalorder %s14, 1
      %p116 = scmp.ne.s32.totalorder %s111, %s113
      %p117 = scmp.eq.s32.totalorder %s14, 0
      %p118 = por %p116, %p117
      %p119 = scmp.ne.s32.totalorder %s111, %s113
      %p120 = scmp.eq.s32.totalorder %s19, 1
      %p121 = por %p119, %p120
      %p122 = scmp.ne.s32.totalorder %s113, %s114
      %p123 = scmp.eq.s32.totalorder %s19, 0
      %p124 = por %p122, %p123
      %p125 = scmp.ne.s32.totalorder %s113, %s114
      %p126 = scmp.eq.s32.totalorder %s20, 1
      %p127 = por %p125, %p126
      %p129 = scmp.ne.s32.totalorder %s114, %s128
      %p130 = scmp.eq.s32.totalorder %s20, 0
      %p131 = por %p129, %p130
      %s132 = ssub.s32 %s14, %s21
      %p133 = scmp.eq.s32.totalorder %s132, 0
      %s135 = sadd.s32 %s134, 1
      %s136 = scalar_select %p133, %s134, %s135
      %p139 = pneg %p133
      %p140 = scmp.eq.s32.totalorder %s14, 1
      %p141 = por %p139, %p140
      %p142 = scmp.ne.s32.totalorder %s134, %s137
      %p143 = scmp.eq.s32.totalorder %s14, 0
      %p144 = por %p142, %p143
      %p145 = scmp.ne.s32.totalorder %s134, %s137
      %p146 = scmp.eq.s32.totalorder %s19, 1
      %p147 = por %p145, %p146
      %p148 = scmp.ne.s32.totalorder %s137, %s138
      %p149 = scmp.eq.s32.totalorder %s19, 0
      %p150 = por %p148, %p149
      %p151 = scmp.ne.s32.totalorder %s137, %s138
      %p152 = scmp.eq.s32.totalorder %s20, 1
      %p153 = por %p151, %p152
      %p155 = scmp.ne.s32.totalorder %s138, %s154
      %p156 = scmp.eq.s32.totalorder %s20, 0
      %p157 = por %p155, %p156
      %p158 = scmp.le.s32.totalorder 1, %s14
      %p159 = scmp.lt.s32.totalorder %s14, 3
      %p160 = pnand %p158, %p159
      %p161 = pneg %p160
      // Predicated region
      $region9: #{tpu_custom_call.1} parent=5 // pred_check
        _
      $region10: #{tpu_custom_call.1} parent=5 // pred_check_branch
        %163 = sbr.rel (%p160) target = $region12
      $region11: #{tpu_custom_call.1} parent=5 // pred_region
        %s164 = ssub.s32 %s14, 1
        // Predicated region
        $region13: #{tpu_custom_call.1} parent=11 // pred_check
          %p165 = pneg %p61
        $region14: #{tpu_custom_call.1} parent=11 // pred_check_branch
          %167 = sbr.rel (%p165) target = $region16
        $region15: #{tpu_custom_call.1} parent=11 // pred_region
          _
        $region16: #{tpu_custom_call.1} parent=11 // pred_fallthru
          _
        // Predicated region
        $region17: #{tpu_custom_call.1} parent=11 // pred_check
          %p168 = pneg %p82
        $region18: #{tpu_custom_call.1} parent=11 // pred_check_branch
          %170 = sbr.rel (%p168) target = $region20
        $region19: #{tpu_custom_call.1} parent=11 // pred_region
          _
        $region20: #{tpu_custom_call.1} parent=11 // pred_fallthru
          _
        // Predicated region
        $region21: #{tpu_custom_call.1} parent=11 // pred_check
          %p171 = pneg %p103
        $region22: #{tpu_custom_call.1} parent=11 // pred_check_branch
          %173 = sbr.rel (%p171) target = $region24
        $region23: #{tpu_custom_call.1} parent=11 // pred_region
          _
        $region24: #{tpu_custom_call.1} parent=11 // pred_fallthru
          _
        // Predicated region
        $region25: #{tpu_custom_call.1} parent=11 // pred_check
          %p174 = pneg %p124
        $region26: #{tpu_custom_call.1} parent=11 // pred_check_branch
          %176 = sbr.rel (%p174) target = $region28
        $region27: #{tpu_custom_call.1} parent=11 // pred_region
          _
        $region28: #{tpu_custom_call.1} parent=11 // pred_fallthru
          _
      $region12: #{tpu_custom_call.1} parent=5 // pred_fallthru
        _
      %p177 = scmp.lt.s32.totalorder %s14, 2
      // Predicated region
      $region29: #{tpu_custom_call.1} parent=5 // pred_check
        %p178 = pneg %p177
      $region30: #{tpu_custom_call.1} parent=5 // pred_check_branch
        %180 = sbr.rel (%p178) target = $region32
      $region31: #{tpu_custom_call.1} parent=5 // pred_region
        // Predicated region
        $region33: #{tpu_custom_call.1} parent=31 // pred_check
          %p181 = pneg %p34
        $region34: #{tpu_custom_call.1} parent=31 // pred_check_branch
          %183 = sbr.rel (%p181) target = $region36
        $region35: #{tpu_custom_call.1} parent=31 // pred_region
          %p184 = scmp.lt.s32.totalorder %s14, 1
          %s185 = scalar_select %p184, %s14, 1
          %s186 = smul.addr %s185, 2
          %s187 = smul.addr %s186, 4
          %s188 = scalar_lea.vmem %s0, %s187
        $region36: #{tpu_custom_call.1} parent=31 // pred_fallthru
          _
      $region32: #{tpu_custom_call.1} parent=5 // pred_fallthru
        _
      %p189 = scmp.le.s32.totalorder 1, %s14
      %p190 = scmp.lt.s32.totalorder %s14, 3
      %p191 = pnand %p189, %p190
      %p192 = pneg %p191
      // Predicated region
      $region37: #{tpu_custom_call.1} parent=5 // pred_check
        _
      $region38: #{tpu_custom_call.1} parent=5 // pred_check_branch
        %194 = sbr.rel (%p191) target = $region40
      $region39: #{tpu_custom_call.1} parent=5 // pred_region
        %s195 = ssub.s32 %s14, 1
        %p196 = scmp.lt.s32.totalorder %s19, 1
        %s197 = scalar_select %p196, %s19, 1
        %s198 = smul.addr %s197, 2
        %s199 = smul.addr %s198, 4
        %s200 = scalar_lea.vmem %s0, %s199
        %p201 = pneg %p40
        %p202 = pneg %p37
        %p203 = pneg %p61
        %p204 = pneg %p58
        %p205 = pneg %p82
        %p206 = pneg %p79
        %p207 = pneg %p103
        %p208 = pneg %p100
        %p209 = pneg %p124
        %p210 = pneg %p121
        %p211 = pneg %p150
        %p212 = pneg %p147
        %s213 = sand.u32 %s137, 1
        %s214 = scalar_lea.sflag [#allocation4], %s213
        %s215 = sand.u32 %s137, 1
        %s216 = smul.addr %s215, 16
        %s217 = scalar_lea.vmem [#allocation3], %s216
        %p218 = scmp.lt.s32.totalorder %s19, 1
        %s219 = scalar_select %p218, %s19, 1
        %s220 = smul.addr %s219, 2
        %s221 = smul.addr %s220, 4
        %s222 = scalar_lea.vmem %s0, %s221
        %223 = vst [vmem:[#allocation2] sm:$0xff] 0.0
        %vm224 = vcmask 273408
        %225 = vst.msk [vmem:[#allocation2 + $0x8] sm:$0xf] %vm224, 0.0
        %v226 = vld [vmem:[%s3] sm:$0xff]
        %v227 = vld [vmem:[%s4] sm:$0xff]
        %v228 = vld [vmem:[%s222] sm:$0xff]
        %230 = vrot.lane.b32.xlu0 %v228, 17
        %v231 = vpop.permute.xlu0 %230
        %v232 = vrot.slane %v231, 4
        %vm233 = vcmask 138240
        %v234 = vsel %vm233, %v232, %v231
        %vm237 = vcmask 1043592
        %vm238 = vcmask 1047556
        %vm239 = vmor %vm238, %vm237
        %240 = vst.msk [vmem:[#allocation2] sm:$0xff] %vm239, %v234
        %vm241 = vcmask 134144
        %242 = vst.msk [vmem:[#allocation2 + $0x8] sm:$0xf] %vm241, %v232
        %v243 = vld [vmem:[#allocation2] sm:$0xff]
        %v244 = vld [vmem:[%s2] ss:$4 sm:$0x3]
        %v246 = vlaneseq
        %v247 = vshrl.u32 %v246, 7
        %v248 = vsub.s32 0, %v247
        %v249 = vrot.slane %v244, %v248
        %v250 = vlaneseq
        %v251 = vshrl.u32 %v250, 7
        %v252 = vsub.s32 1, %v251
        %v253 = vrot.slane %v244, %v252
        %v254 = vcombine.low %v249, %v253
        %v256 = vmul.f32 %v243, %v254
        %v257 = vld [vmem:[%s1] sm:$0xff]
        %v258 = vld [vmem:[#allocation2 + $0x8] sm:$0xf]
        %s259 = scalar_lea.vmem %s1, 8
        %v260 = vld [vmem:[%s259] sm:$0xff]
        %v263 = vcombine.high %v243, %v243
        %264 = vrot.lane.b32.xlu0 %v243, 127
        %v265 = vpop.permute.xlu0 %264
        %266 = vrot.lane.b32.xlu0 %v263, 127
        %v267 = vpop.permute.xlu0 %266
        %268 = vrot.lane.b32.xlu0 %v258, 127
        %v269 = vpop.permute.xlu0 %268
        %vm270 = vcmask 1039360
        %v271 = vsel %vm270, %v265, %v267
        %v272 = vsel %vm270, %v267, %v269
        %vm273 = vcmask 31744
        %v275 = vsel %vm273, %v260, 0
        %vm277 = vcmask 1043456
        %v278 = vsel %vm277, %v271, 0
        %v280 = vsel %vm277, %v272, 0
        %282 = vmatprep.subr.mxu0 0.0
        %283 = vmatpush1.msra.mxu0 0.0
        %284 = vmatprep.subr.mxu0 0.0
        %285 = vmatpush1.msra.mxu0 0.0
        %286 = vmatprep.subr.mxu0 0.0
        %287 = vmatpush1.msra.mxu0 0.0
        %288 = vmatprep.subr.mxu0 0.0
        %289 = vmatpush1.msra.mxu0 0.0
        %290 = vmatprep.subr.mxu0 0.0
        %291 = vmatpush1.msra.mxu0 0.0
        %292 = vmatprep.subr.mxu0 0.0
        %293 = vmatpush1.msra.mxu0 0.0
        %294 = vmatprep.subr.mxu0 0.0
        %295 = vmatpush1.msra.mxu0 0.0
        %296 = vmatprep.subr.mxu0 0.0
        %297 = vmatpush1.msra.mxu0 0.0
        %298 = vmatprep.subr.mxu0 0.0
        %299 = vmatpush1.msra.mxu0 0.0
        %300 = vmatprep.subr.mxu0 0.0
        %301 = vmatpush1.msra.mxu0 0.0
        %302 = vmatprep.subr.mxu0 0.0
        %303 = vmatpush1.msra.mxu0 0.0
        %304 = vmatprep.subr.mxu0 0.0
        %305 = vmatpush1.msra.mxu0 0.0
        %306 = vmatprep.subr.mxu0 0.0
        %307 = vmatpush1.msra.mxu0 0.0
        %308 = vmatprep.subr.mxu0 0.0
        %309 = vmatpush1.msra.mxu0 0.0
        %310 = vmatprep.subr.mxu0 0.0
        %311 = vmatpush1.msra.mxu0 0.0
        %312 = vmatprep.subr.mxu0 %v280
        %313 = vmatpush1.msra.mxu0 %v278
        %314 = vmatprep.subr.mxu0 0.0
        %315 = vmatpush2.msra.mxu0 0.0
        %316 = vmatprep.subr.mxu0 0.0
        %317 = vmatpush2.msra.mxu0 0.0
        %318 = vmatprep.subr.mxu0 0.0
        %319 = vmatpush2.msra.mxu0 0.0
        %320 = vmatprep.subr.mxu0 0.0
        %321 = vmatpush2.msra.mxu0 0.0
        %322 = vmatprep.subr.mxu0 0.0
        %323 = vmatpush2.msra.mxu0 0.0
        %324 = vmatprep.subr.mxu0 0.0
        %325 = vmatpush2.msra.mxu0 0.0
        %326 = vmatprep.subr.mxu0 0.0
        %327 = vmatpush2.msra.mxu0 0.0
        %328 = vmatprep.subr.mxu0 0.0
        %329 = vmatpush2.msra.mxu0 0.0
        %330 = vmatprep.subr.mxu0 0.0
        %331 = vmatpush2.msra.mxu0 0.0
        %332 = vmatprep.subr.mxu0 0.0
        %333 = vmatpush2.msra.mxu0 0.0
        %334 = vmatprep.subr.mxu0 0.0
        %335 = vmatpush2.msra.mxu0 0.0
        %336 = vmatprep.subr.mxu0 0.0
        %337 = vmatpush2.msra.mxu0 0.0
        %338 = vmatprep.subr.mxu0 0.0
        %339 = vmatpush2.msra.mxu0 0.0
        %340 = vmatprep.subr.mxu0 0.0
        %341 = vmatpush2.msra.mxu0 0.0
        %342 = vmatprep.subr.mxu0 0.0
        %343 = vmatpush2.msra.mxu0 0.0
        %344 = vmatprep.subr.mxu0 0.0
        %345 = vmatpush2.msra.mxu0 0.0
        %346 = vmatprep.mubr.f32.mxu0 0.0
        %347 = vmatmul.mubr.f32.gmra.mxu0 %v275
        %v348 = vpop.f32.mrf.mxu0
        %v349 = vadd.f32 0.0, %v348
        %v350 = vpop.f32.mrf.mxu0
        %v351 = vadd.f32 0.0, %v350
        %352 = vdwg.mxu0
        %v354 = vcombine.high %v256, %v256
        %v356 = vsel %vm273, %v257, 0
        %v358 = vsel %vm277, %v256, 0
        %v360 = vsel %vm277, %v354, 0
        %362 = vmatprep.subr.mxu0 0.0
        %363 = vmatpush1.msra.mxu0 0.0
        %364 = vmatprep.subr.mxu0 0.0
        %365 = vmatpush1.msra.mxu0 0.0
        %366 = vmatprep.subr.mxu0 0.0
        %367 = vmatpush1.msra.mxu0 0.0
        %368 = vmatprep.subr.mxu0 0.0
        %369 = vmatpush1.msra.mxu0 0.0
        %370 = vmatprep.subr.mxu0 0.0
        %371 = vmatpush1.msra.mxu0 0.0
        %372 = vmatprep.subr.mxu0 0.0
        %373 = vmatpush1.msra.mxu0 0.0
        %374 = vmatprep.subr.mxu0 0.0
        %375 = vmatpush1.msra.mxu0 0.0
        %376 = vmatprep.subr.mxu0 0.0
        %377 = vmatpush1.msra.mxu0 0.0
        %378 = vmatprep.subr.mxu0 0.0
        %379 = vmatpush1.msra.mxu0 0.0
        %380 = vmatprep.subr.mxu0 0.0
        %381 = vmatpush1.msra.mxu0 0.0
        %382 = vmatprep.subr.mxu0 0.0
        %383 = vmatpush1.msra.mxu0 0.0
        %384 = vmatprep.subr.mxu0 0.0
        %385 = vmatpush1.msra.mxu0 0.0
        %386 = vmatprep.subr.mxu0 0.0
        %387 = vmatpush1.msra.mxu0 0.0
        %388 = vmatprep.subr.mxu0 0.0
        %389 = vmatpush1.msra.mxu0 0.0
        %390 = vmatprep.subr.mxu0 0.0
        %391 = vmatpush1.msra.mxu0 0.0
        %392 = vmatprep.subr.mxu0 %v360
        %393 = vmatpush1.msra.mxu0 %v358
        %394 = vmatprep.subr.mxu0 0.0
        %395 = vmatpush2.msra.mxu0 0.0
        %396 = vmatprep.subr.mxu0 0.0
        %397 = vmatpush2.msra.mxu0 0.0
        %398 = vmatprep.subr.mxu0 0.0
        %399 = vmatpush2.msra.mxu0 0.0
        %400 = vmatprep.subr.mxu0 0.0
        %401 = vmatpush2.msra.mxu0 0.0
        %402 = vmatprep.subr.mxu0 0.0
        %403 = vmatpush2.msra.mxu0 0.0
        %404 = vmatprep.subr.mxu0 0.0
        %405 = vmatpush2.msra.mxu0 0.0
        %406 = vmatprep.subr.mxu0 0.0
        %407 = vmatpush2.msra.mxu0 0.0
        %408 = vmatprep.subr.mxu0 0.0
        %409 = vmatpush2.msra.mxu0 0.0
        %410 = vmatprep.subr.mxu0 0.0
        %411 = vmatpush2.msra.mxu0 0.0
        %412 = vmatprep.subr.mxu0 0.0
        %413 = vmatpush2.msra.mxu0 0.0
        %414 = vmatprep.subr.mxu0 0.0
        %415 = vmatpush2.msra.mxu0 0.0
        %416 = vmatprep.subr.mxu0 0.0
        %417 = vmatpush2.msra.mxu0 0.0
        %418 = vmatprep.subr.mxu0 0.0
        %419 = vmatpush2.msra.mxu0 0.0
        %420 = vmatprep.subr.mxu0 0.0
        %421 = vmatpush2.msra.mxu0 0.0
        %422 = vmatprep.subr.mxu0 0.0
        %423 = vmatpush2.msra.mxu0 0.0
        %424 = vmatprep.subr.mxu0 0.0
        %425 = vmatpush2.msra.mxu0 0.0
        %426 = vmatprep.mubr.f32.mxu0 0.0
        %427 = vmatmul.mubr.f32.gmra.mxu0 %v356
        %v428 = vpop.f32.mrf.mxu0
        %v429 = vadd.f32 %v349, %v428
        %v430 = vpop.f32.mrf.mxu0
        %v431 = vadd.f32 %v351, %v430
        %432 = vdwg.mxu0
        %v433 = vld [vmem:[#allocation2] sm:$0xff]
        %v434 = vld [vmem:[#allocation2 + $0x8] sm:$0xf]
        %s435 = scalar_lea.vmem %s2, 2
        %v436 = vld [vmem:[%s435] ss:$4 sm:$0x3]
        %v438 = vlaneseq
        %v439 = vshrl.u32 %v438, 7
        %v440 = vsub.s32 0, %v439
        %v441 = vrot.slane %v436, %v440
        %v442 = vlaneseq
        %v443 = vshrl.u32 %v442, 7
        %v444 = vsub.s32 1, %v443
        %v445 = vrot.slane %v436, %v444
        %v446 = vcombine.low %v441, %v445
        %447 = vrot.lane.b32.xlu0 %v446, 2
        %v448 = vpop.permute.xlu0 %447
        %v449 = vrot.slane %v448, 4
        %vm450 = vcmask 15360
        %v451 = vsel %vm450, %v449, %v448
        %v454 = vmul.f32 %v433, %v451
        %v455 = vmul.f32 %v434, %v449
        %s456 = scalar_lea.vmem %s1, 16
        %v457 = vld [vmem:[%s456] sm:$0xff]
        %v460 = vcombine.high %v454, %v454
        %461 = vrot.lane.b32.xlu0 %v454, 126
        %v462 = vpop.permute.xlu0 %461
        %463 = vrot.lane.b32.xlu0 %v460, 126
        %v464 = vpop.permute.xlu0 %463
        %465 = vrot.lane.b32.xlu0 %v455, 126
        %v466 = vpop.permute.xlu0 %465
        %vm467 = vcmask 1031168
        %v468 = vsel %vm467, %v462, %v464
        %v469 = vsel %vm467, %v464, %v466
        %v471 = vsel %vm273, %v457, 0
        %v473 = vsel %vm277, %v468, 0
        %v475 = vsel %vm277, %v469, 0
        %477 = vmatprep.subr.mxu0 0.0
        %478 = vmatpush1.msra.mxu0 0.0
        %479 = vmatprep.subr.mxu0 0.0
        %480 = vmatpush1.msra.mxu0 0.0
        %481 = vmatprep.subr.mxu0 0.0
        %482 = vmatpush1.msra.mxu0 0.0
        %483 = vmatprep.subr.mxu0 0.0
        %484 = vmatpush1.msra.mxu0 0.0
        %485 = vmatprep.subr.mxu0 0.0
        %486 = vmatpush1.msra.mxu0 0.0
        %487 = vmatprep.subr.mxu0 0.0
        %488 = vmatpush1.msra.mxu0 0.0
        %489 = vmatprep.subr.mxu0 0.0
        %490 = vmatpush1.msra.mxu0 0.0
        %491 = vmatprep.subr.mxu0 0.0
        %492 = vmatpush1.msra.mxu0 0.0
        %493 = vmatprep.subr.mxu0 0.0
        %494 = vmatpush1.msra.mxu0 0.0
        %495 = vmatprep.subr.mxu0 0.0
        %496 = vmatpush1.msra.mxu0 0.0
        %497 = vmatprep.subr.mxu0 0.0
        %498 = vmatpush1.msra.mxu0 0.0
        %499 = vmatprep.subr.mxu0 0.0
        %500 = vmatpush1.msra.mxu0 0.0
        %501 = vmatprep.subr.mxu0 0.0
        %502 = vmatpush1.msra.mxu0 0.0
        %503 = vmatprep.subr.mxu0 0.0
        %504 = vmatpush1.msra.mxu0 0.0
        %505 = vmatprep.subr.mxu0 0.0
        %506 = vmatpush1.msra.mxu0 0.0
        %507 = vmatprep.subr.mxu0 %v475
        %508 = vmatpush1.msra.mxu0 %v473
        %509 = vmatprep.subr.mxu0 0.0
        %510 = vmatpush2.msra.mxu0 0.0
        %511 = vmatprep.subr.mxu0 0.0
        %512 = vmatpush2.msra.mxu0 0.0
        %513 = vmatprep.subr.mxu0 0.0
        %514 = vmatpush2.msra.mxu0 0.0
        %515 = vmatprep.subr.mxu0 0.0
        %516 = vmatpush2.msra.mxu0 0.0
        %517 = vmatprep.subr.mxu0 0.0
        %518 = vmatpush2.msra.mxu0 0.0
        %519 = vmatprep.subr.mxu0 0.0
        %520 = vmatpush2.msra.mxu0 0.0
        %521 = vmatprep.subr.mxu0 0.0
        %522 = vmatpush2.msra.mxu0 0.0
        %523 = vmatprep.subr.mxu0 0.0
        %524 = vmatpush2.msra.mxu0 0.0
        %525 = vmatprep.subr.mxu0 0.0
        %526 = vmatpush2.msra.mxu0 0.0
        %527 = vmatprep.subr.mxu0 0.0
        %528 = vmatpush2.msra.mxu0 0.0
        %529 = vmatprep.subr.mxu0 0.0
        %530 = vmatpush2.msra.mxu0 0.0
        %531 = vmatprep.subr.mxu0 0.0
        %532 = vmatpush2.msra.mxu0 0.0
        %533 = vmatprep.subr.mxu0 0.0
        %534 = vmatpush2.msra.mxu0 0.0
        %535 = vmatprep.subr.mxu0 0.0
        %536 = vmatpush2.msra.mxu0 0.0
        %537 = vmatprep.subr.mxu0 0.0
        %538 = vmatpush2.msra.mxu0 0.0
        %539 = vmatprep.subr.mxu0 0.0
        %540 = vmatpush2.msra.mxu0 0.0
        %541 = vmatprep.mubr.f32.mxu0 0.0
        %542 = vmatmul.mubr.f32.gmra.mxu0 %v471
        %v543 = vpop.f32.mrf.mxu0
        %v544 = vadd.f32 0.0, %v543
        %v545 = vpop.f32.mrf.mxu0
        %v546 = vadd.f32 0.0, %v545
        %547 = vdwg.mxu0
        %v548 = vadd.f32 %v429, %v544
        %v549 = vadd.f32 %v431, %v546
        %v550 = vld [vmem:[#allocation2] sm:$0xff]
        %v551 = vld [vmem:[#allocation2 + $0x8] sm:$0xf]
        %552 = vrot.lane.b32.xlu0 %v254, 16
        %v553 = vpop.permute.xlu0 %552
        %v554 = vrot.slane %v553, 4
        %vm555 = vcmask 130048
        %v556 = vsel %vm555, %v554, %v553
        %v559 = vmul.f32 %v550, %v556
        %v560 = vmul.f32 %v551, %v554
        %s561 = scalar_lea.vmem %s1, 24
        %v562 = vld [vmem:[%s561] sm:$0xff]
        %v565 = vcombine.high %v559, %v559
        %566 = vrot.lane.b32.xlu0 %v559, 112
        %v567 = vpop.permute.xlu0 %566
        %568 = vrot.lane.b32.xlu0 %v565, 112
        %v569 = vpop.permute.xlu0 %568
        %570 = vrot.lane.b32.xlu0 %v560, 112
        %v571 = vpop.permute.xlu0 %570
        %vm572 = vcmask 916480
        %v573 = vsel %vm572, %v567, %v569
        %v574 = vsel %vm572, %v569, %v571
        %v576 = vsel %vm273, %v562, 0
        %v578 = vsel %vm277, %v573, 0
        %v580 = vsel %vm277, %v574, 0
        %582 = vmatprep.subr.mxu0 0.0
        %583 = vmatpush1.msra.mxu0 0.0
        %584 = vmatprep.subr.mxu0 0.0
        %585 = vmatpush1.msra.mxu0 0.0
        %586 = vmatprep.subr.mxu0 0.0
        %587 = vmatpush1.msra.mxu0 0.0
        %588 = vmatprep.subr.mxu0 0.0
        %589 = vmatpush1.msra.mxu0 0.0
        %590 = vmatprep.subr.mxu0 0.0
        %591 = vmatpush1.msra.mxu0 0.0
        %592 = vmatprep.subr.mxu0 0.0
        %593 = vmatpush1.msra.mxu0 0.0
        %594 = vmatprep.subr.mxu0 0.0
        %595 = vmatpush1.msra.mxu0 0.0
        %596 = vmatprep.subr.mxu0 0.0
        %597 = vmatpush1.msra.mxu0 0.0
        %598 = vmatprep.subr.mxu0 0.0
        %599 = vmatpush1.msra.mxu0 0.0
        %600 = vmatprep.subr.mxu0 0.0
        %601 = vmatpush1.msra.mxu0 0.0
        %602 = vmatprep.subr.mxu0 0.0
        %603 = vmatpush1.msra.mxu0 0.0
        %604 = vmatprep.subr.mxu0 0.0
        %605 = vmatpush1.msra.mxu0 0.0
        %606 = vmatprep.subr.mxu0 0.0
        %607 = vmatpush1.msra.mxu0 0.0
        %608 = vmatprep.subr.mxu0 0.0
        %609 = vmatpush1.msra.mxu0 0.0
        %610 = vmatprep.subr.mxu0 0.0
        %611 = vmatpush1.msra.mxu0 0.0
        %612 = vmatprep.subr.mxu0 %v580
        %613 = vmatpush1.msra.mxu0 %v578
        %614 = vmatprep.subr.mxu0 0.0
        %615 = vmatpush2.msra.mxu0 0.0
        %616 = vmatprep.subr.mxu0 0.0
        %617 = vmatpush2.msra.mxu0 0.0
        %618 = vmatprep.subr.mxu0 0.0
        %619 = vmatpush2.msra.mxu0 0.0
        %620 = vmatprep.subr.mxu0 0.0
        %621 = vmatpush2.msra.mxu0 0.0
        %622 = vmatprep.subr.mxu0 0.0
        %623 = vmatpush2.msra.mxu0 0.0
        %624 = vmatprep.subr.mxu0 0.0
        %625 = vmatpush2.msra.mxu0 0.0
        %626 = vmatprep.subr.mxu0 0.0
        %627 = vmatpush2.msra.mxu0 0.0
        %628 = vmatprep.subr.mxu0 0.0
        %629 = vmatpush2.msra.mxu0 0.0
        %630 = vmatprep.subr.mxu0 0.0
        %631 = vmatpush2.msra.mxu0 0.0
        %632 = vmatprep.subr.mxu0 0.0
        %633 = vmatpush2.msra.mxu0 0.0
        %634 = vmatprep.subr.mxu0 0.0
        %635 = vmatpush2.msra.mxu0 0.0
        %636 = vmatprep.subr.mxu0 0.0
        %637 = vmatpush2.msra.mxu0 0.0
        %638 = vmatprep.subr.mxu0 0.0
        %639 = vmatpush2.msra.mxu0 0.0
        %640 = vmatprep.subr.mxu0 0.0
        %641 = vmatpush2.msra.mxu0 0.0
        %642 = vmatprep.subr.mxu0 0.0
        %643 = vmatpush2.msra.mxu0 0.0
        %644 = vmatprep.subr.mxu0 0.0
        %645 = vmatpush2.msra.mxu0 0.0
        %646 = vmatprep.mubr.f32.mxu0 0.0
        %647 = vmatmul.mubr.f32.gmra.mxu0 %v576
        %v648 = vpop.f32.mrf.mxu0
        %v649 = vadd.f32 0.0, %v648
        %v650 = vpop.f32.mrf.mxu0
        %v651 = vadd.f32 0.0, %v650
        %652 = vdwg.mxu0
        %v653 = vadd.f32 %v548, %v649
        %v654 = vadd.f32 %v549, %v651
        %v655 = vld [vmem:[#allocation2] sm:$0xff]
        %v656 = vld [vmem:[#allocation2 + $0x8] sm:$0xf]
        %s657 = scalar_lea.vmem %s1, 32
        %v658 = vld [vmem:[%s657] sm:$0xff]
        %v661 = vcombine.high %v655, %v655
        %662 = vrot.lane.b32.xlu0 %v655, 111
        %v663 = vpop.permute.xlu0 %662
        %664 = vrot.lane.b32.xlu0 %v661, 111
        %v665 = vpop.permute.xlu0 %664
        %666 = vrot.lane.b32.xlu0 %v656, 111
        %v667 = vpop.permute.xlu0 %666
        %vm668 = vcmask 908288
        %v669 = vsel %vm668, %v663, %v665
        %v670 = vsel %vm668, %v665, %v667
        %v672 = vsel %vm273, %v658, 0
        %v674 = vsel %vm277, %v669, 0
        %v676 = vsel %vm277, %v670, 0
        %678 = vmatprep.subr.mxu0 0.0
        %679 = vmatpush1.msra.mxu0 0.0
        %680 = vmatprep.subr.mxu0 0.0
        %681 = vmatpush1.msra.mxu0 0.0
        %682 = vmatprep.subr.mxu0 0.0
        %683 = vmatpush1.msra.mxu0 0.0
        %684 = vmatprep.subr.mxu0 0.0
        %685 = vmatpush1.msra.mxu0 0.0
        %686 = vmatprep.subr.mxu0 0.0
        %687 = vmatpush1.msra.mxu0 0.0
        %688 = vmatprep.subr.mxu0 0.0
        %689 = vmatpush1.msra.mxu0 0.0
        %690 = vmatprep.subr.mxu0 0.0
        %691 = vmatpush1.msra.mxu0 0.0
        %692 = vmatprep.subr.mxu0 0.0
        %693 = vmatpush1.msra.mxu0 0.0
        %694 = vmatprep.subr.mxu0 0.0
        %695 = vmatpush1.msra.mxu0 0.0
        %696 = vmatprep.subr.mxu0 0.0
        %697 = vmatpush1.msra.mxu0 0.0
        %698 = vmatprep.subr.mxu0 0.0
        %699 = vmatpush1.msra.mxu0 0.0
        %700 = vmatprep.subr.mxu0 0.0
        %701 = vmatpush1.msra.mxu0 0.0
        %702 = vmatprep.subr.mxu0 0.0
        %703 = vmatpush1.msra.mxu0 0.0
        %704 = vmatprep.subr.mxu0 0.0
        %705 = vmatpush1.msra.mxu0 0.0
        %706 = vmatprep.subr.mxu0 0.0
        %707 = vmatpush1.msra.mxu0 0.0
        %708 = vmatprep.subr.mxu0 %v676
        %709 = vmatpush1.msra.mxu0 %v674
        %710 = vmatprep.subr.mxu0 0.0
        %711 = vmatpush2.msra.mxu0 0.0
        %712 = vmatprep.subr.mxu0 0.0
        %713 = vmatpush2.msra.mxu0 0.0
        %714 = vmatprep.subr.mxu0 0.0
        %715 = vmatpush2.msra.mxu0 0.0
        %716 = vmatprep.subr.mxu0 0.0
        %717 = vmatpush2.msra.mxu0 0.0
        %718 = vmatprep.subr.mxu0 0.0
        %719 = vmatpush2.msra.mxu0 0.0
        %720 = vmatprep.subr.mxu0 0.0
        %721 = vmatpush2.msra.mxu0 0.0
        %722 = vmatprep.subr.mxu0 0.0
        %723 = vmatpush2.msra.mxu0 0.0
        %724 = vmatprep.subr.mxu0 0.0
        %725 = vmatpush2.msra.mxu0 0.0
        %726 = vmatprep.subr.mxu0 0.0
        %727 = vmatpush2.msra.mxu0 0.0
        %728 = vmatprep.subr.mxu0 0.0
        %729 = vmatpush2.msra.mxu0 0.0
        %730 = vmatprep.subr.mxu0 0.0
        %731 = vmatpush2.msra.mxu0 0.0
        %732 = vmatprep.subr.mxu0 0.0
        %733 = vmatpush2.msra.mxu0 0.0
        %734 = vmatprep.subr.mxu0 0.0
        %735 = vmatpush2.msra.mxu0 0.0
        %736 = vmatprep.subr.mxu0 0.0
        %737 = vmatpush2.msra.mxu0 0.0
        %738 = vmatprep.subr.mxu0 0.0
        %739 = vmatpush2.msra.mxu0 0.0
        %740 = vmatprep.subr.mxu0 0.0
        %741 = vmatpush2.msra.mxu0 0.0
        %742 = vmatprep.mubr.f32.mxu0 0.0
        %743 = vmatmul.mubr.f32.gmra.mxu0 %v672
        %v744 = vpop.f32.mrf.mxu0
        %v745 = vadd.f32 0.0, %v744
        %v746 = vpop.f32.mrf.mxu0
        %v747 = vadd.f32 0.0, %v746
        %748 = vdwg.mxu0
        %v749 = vadd.f32 %v653, %v745
        %v750 = vadd.f32 %v654, %v747
        %v751 = vld [vmem:[#allocation2] sm:$0xff]
        %v752 = vld [vmem:[#allocation2 + $0x8] sm:$0xf]
        %753 = vrot.lane.b32.xlu0 %v446, 18
        %v754 = vpop.permute.xlu0 %753
        %v755 = vrot.slane %v754, 4
        %vm756 = vcmask 146432
        %v757 = vsel %vm756, %v755, %v754
        %v760 = vmul.f32 %v751, %v757
        %v761 = vmul.f32 %v752, %v755
        %s762 = scalar_lea.vmem %s1, 40
        %v763 = vld [vmem:[%s762] sm:$0xff]
        %v766 = vcombine.high %v760, %v760
        %767 = vrot.lane.b32.xlu0 %v760, 110
        %v768 = vpop.permute.xlu0 %767
        %769 = vrot.lane.b32.xlu0 %v766, 110
        %v770 = vpop.permute.xlu0 %769
        %771 = vrot.lane.b32.xlu0 %v761, 110
        %v772 = vpop.permute.xlu0 %771
        %vm773 = vcmask 900096
        %v774 = vsel %vm773, %v768, %v770
        %v775 = vsel %vm773, %v770, %v772
        %v777 = vsel %vm273, %v763, 0
        %v779 = vsel %vm277, %v774, 0
        %v781 = vsel %vm277, %v775, 0
        %783 = vmatprep.subr.mxu0 0.0
        %784 = vmatpush1.msra.mxu0 0.0
        %785 = vmatprep.subr.mxu0 0.0
        %786 = vmatpush1.msra.mxu0 0.0
        %787 = vmatprep.subr.mxu0 0.0
        %788 = vmatpush1.msra.mxu0 0.0
        %789 = vmatprep.subr.mxu0 0.0
        %790 = vmatpush1.msra.mxu0 0.0
        %791 = vmatprep.subr.mxu0 0.0
        %792 = vmatpush1.msra.mxu0 0.0
        %793 = vmatprep.subr.mxu0 0.0
        %794 = vmatpush1.msra.mxu0 0.0
        %795 = vmatprep.subr.mxu0 0.0
        %796 = vmatpush1.msra.mxu0 0.0
        %797 = vmatprep.subr.mxu0 0.0
        %798 = vmatpush1.msra.mxu0 0.0
        %799 = vmatprep.subr.mxu0 0.0
        %800 = vmatpush1.msra.mxu0 0.0
        %801 = vmatprep.subr.mxu0 0.0
        %802 = vmatpush1.msra.mxu0 0.0
        %803 = vmatprep.subr.mxu0 0.0
        %804 = vmatpush1.msra.mxu0 0.0
        %805 = vmatprep.subr.mxu0 0.0
        %806 = vmatpush1.msra.mxu0 0.0
        %807 = vmatprep.subr.mxu0 0.0
        %808 = vmatpush1.msra.mxu0 0.0
        %809 = vmatprep.subr.mxu0 0.0
        %810 = vmatpush1.msra.mxu0 0.0
        %811 = vmatprep.subr.mxu0 0.0
        %812 = vmatpush1.msra.mxu0 0.0
        %813 = vmatprep.subr.mxu0 %v781
        %814 = vmatpush1.msra.mxu0 %v779
        %815 = vmatprep.subr.mxu0 0.0
        %816 = vmatpush2.msra.mxu0 0.0
        %817 = vmatprep.subr.mxu0 0.0
        %818 = vmatpush2.msra.mxu0 0.0
        %819 = vmatprep.subr.mxu0 0.0
        %820 = vmatpush2.msra.mxu0 0.0
        %821 = vmatprep.subr.mxu0 0.0
        %822 = vmatpush2.msra.mxu0 0.0
        %823 = vmatprep.subr.mxu0 0.0
        %824 = vmatpush2.msra.mxu0 0.0
        %825 = vmatprep.subr.mxu0 0.0
        %826 = vmatpush2.msra.mxu0 0.0
        %827 = vmatprep.subr.mxu0 0.0
        %828 = vmatpush2.msra.mxu0 0.0
        %829 = vmatprep.subr.mxu0 0.0
        %830 = vmatpush2.msra.mxu0 0.0
        %831 = vmatprep.subr.mxu0 0.0
        %832 = vmatpush2.msra.mxu0 0.0
        %833 = vmatprep.subr.mxu0 0.0
        %834 = vmatpush2.msra.mxu0 0.0
        %835 = vmatprep.subr.mxu0 0.0
        %836 = vmatpush2.msra.mxu0 0.0
        %837 = vmatprep.subr.mxu0 0.0
        %838 = vmatpush2.msra.mxu0 0.0
        %839 = vmatprep.subr.mxu0 0.0
        %840 = vmatpush2.msra.mxu0 0.0
        %841 = vmatprep.subr.mxu0 0.0
        %842 = vmatpush2.msra.mxu0 0.0
        %843 = vmatprep.subr.mxu0 0.0
        %844 = vmatpush2.msra.mxu0 0.0
        %845 = vmatprep.subr.mxu0 0.0
        %846 = vmatpush2.msra.mxu0 0.0
        %847 = vmatprep.mubr.f32.mxu0 0.0
        %848 = vmatmul.mubr.f32.gmra.mxu0 %v777
        %v849 = vpop.f32.mrf.mxu0
        %v850 = vadd.f32 0.0, %v849
        %v851 = vpop.f32.mrf.mxu0
        %v852 = vadd.f32 0.0, %v851
        %853 = vdwg.mxu0
        %v854 = vadd.f32 %v749, %v850
        %v855 = vadd.f32 %v750, %v852
        %v856 = vld [vmem:[#allocation2] sm:$0xff]
        %v857 = vld [vmem:[#allocation2 + $0x8] sm:$0xf]
        %858 = vrot.lane.b32.xlu0 %v254, 32
        %v859 = vpop.permute.xlu0 %858
        %v860 = vrot.slane %v859, 4
        %vm861 = vcmask 261120
        %v862 = vsel %vm861, %v860, %v859
        %v865 = vmul.f32 %v856, %v862
        %v866 = vmul.f32 %v857, %v860
        %s867 = scalar_lea.vmem %s1, 48
        %v868 = vld [vmem:[%s867] sm:$0xff]
        %v871 = vcombine.high %v865, %v865
        %872 = vrot.lane.b32.xlu0 %v865, 96
        %v873 = vpop.permute.xlu0 %872
        %874 = vrot.lane.b32.xlu0 %v871, 96
        %v875 = vpop.permute.xlu0 %874
        %876 = vrot.lane.b32.xlu0 %v866, 96
        %v877 = vpop.permute.xlu0 %876
        %vm878 = vcmask 785408
        %v879 = vsel %vm878, %v873, %v875
        %v880 = vsel %vm878, %v875, %v877
        %v882 = vsel %vm273, %v868, 0
        %v884 = vsel %vm277, %v879, 0
        %v886 = vsel %vm277, %v880, 0
        %888 = vmatprep.subr.mxu0 0.0
        %889 = vmatpush1.msra.mxu0 0.0
        %890 = vmatprep.subr.mxu0 0.0
        %891 = vmatpush1.msra.mxu0 0.0
        %892 = vmatprep.subr.mxu0 0.0
        %893 = vmatpush1.msra.mxu0 0.0
        %894 = vmatprep.subr.mxu0 0.0
        %895 = vmatpush1.msra.mxu0 0.0
        %896 = vmatprep.subr.mxu0 0.0
        %897 = vmatpush1.msra.mxu0 0.0
        %898 = vmatprep.subr.mxu0 0.0
        %899 = vmatpush1.msra.mxu0 0.0
        %900 = vmatprep.subr.mxu0 0.0
        %901 = vmatpush1.msra.mxu0 0.0
        %902 = vmatprep.subr.mxu0 0.0
        %903 = vmatpush1.msra.mxu0 0.0
        %904 = vmatprep.subr.mxu0 0.0
        %905 = vmatpush1.msra.mxu0 0.0
        %906 = vmatprep.subr.mxu0 0.0
        %907 = vmatpush1.msra.mxu0 0.0
        %908 = vmatprep.subr.mxu0 0.0
        %909 = vmatpush1.msra.mxu0 0.0
        %910 = vmatprep.subr.mxu0 0.0
        %911 = vmatpush1.msra.mxu0 0.0
        %912 = vmatprep.subr.mxu0 0.0
        %913 = vmatpush1.msra.mxu0 0.0
        %914 = vmatprep.subr.mxu0 0.0
        %915 = vmatpush1.msra.mxu0 0.0
        %916 = vmatprep.subr.mxu0 0.0
        %917 = vmatpush1.msra.mxu0 0.0
        %918 = vmatprep.subr.mxu0 %v886
        %919 = vmatpush1.msra.mxu0 %v884
        %920 = vmatprep.subr.mxu0 0.0
        %921 = vmatpush2.msra.mxu0 0.0
        %922 = vmatprep.subr.mxu0 0.0
        %923 = vmatpush2.msra.mxu0 0.0
        %924 = vmatprep.subr.mxu0 0.0
        %925 = vmatpush2.msra.mxu0 0.0
        %926 = vmatprep.subr.mxu0 0.0
        %927 = vmatpush2.msra.mxu0 0.0
        %928 = vmatprep.subr.mxu0 0.0
        %929 = vmatpush2.msra.mxu0 0.0
        %930 = vmatprep.subr.mxu0 0.0
        %931 = vmatpush2.msra.mxu0 0.0
        %932 = vmatprep.subr.mxu0 0.0
        %933 = vmatpush2.msra.mxu0 0.0
        %934 = vmatprep.subr.mxu0 0.0
        %935 = vmatpush2.msra.mxu0 0.0
        %936 = vmatprep.subr.mxu0 0.0
        %937 = vmatpush2.msra.mxu0 0.0
        %938 = vmatprep.subr.mxu0 0.0
        %939 = vmatpush2.msra.mxu0 0.0
        %940 = vmatprep.subr.mxu0 0.0
        %941 = vmatpush2.msra.mxu0 0.0
        %942 = vmatprep.subr.mxu0 0.0
        %943 = vmatpush2.msra.mxu0 0.0
        %944 = vmatprep.subr.mxu0 0.0
        %945 = vmatpush2.msra.mxu0 0.0
        %946 = vmatprep.subr.mxu0 0.0
        %947 = vmatpush2.msra.mxu0 0.0
        %948 = vmatprep.subr.mxu0 0.0
        %949 = vmatpush2.msra.mxu0 0.0
        %950 = vmatprep.subr.mxu0 0.0
        %951 = vmatpush2.msra.mxu0 0.0
        %952 = vmatprep.mubr.f32.mxu0 0.0
        %953 = vmatmul.mubr.f32.gmra.mxu0 %v882
        %v954 = vpop.f32.mrf.mxu0
        %v955 = vadd.f32 0.0, %v954
        %v956 = vpop.f32.mrf.mxu0
        %v957 = vadd.f32 0.0, %v956
        %958 = vdwg.mxu0
        %v959 = vadd.f32 %v854, %v955
        %v960 = vadd.f32 %v855, %v957
        %v961 = vld [vmem:[#allocation2] sm:$0xff]
        %v962 = vld [vmem:[#allocation2 + $0x8] sm:$0xf]
        %s963 = scalar_lea.vmem %s1, 56
        %v964 = vld [vmem:[%s963] sm:$0xff]
        %v967 = vcombine.high %v961, %v961
        %968 = vrot.lane.b32.xlu0 %v961, 95
        %v969 = vpop.permute.xlu0 %968
        %970 = vrot.lane.b32.xlu0 %v967, 95
        %v971 = vpop.permute.xlu0 %970
        %972 = vrot.lane.b32.xlu0 %v962, 95
        %v973 = vpop.permute.xlu0 %972
        %vm974 = vcmask 777216
        %v975 = vsel %vm974, %v969, %v971
        %v976 = vsel %vm974, %v971, %v973
        %v978 = vsel %vm273, %v964, 0
        %v980 = vsel %vm277, %v975, 0
        %v982 = vsel %vm277, %v976, 0
        %984 = vmatprep.subr.mxu0 0.0
        %985 = vmatpush1.msra.mxu0 0.0
        %986 = vmatprep.subr.mxu0 0.0
        %987 = vmatpush1.msra.mxu0 0.0
        %988 = vmatprep.subr.mxu0 0.0
        %989 = vmatpush1.msra.mxu0 0.0
        %990 = vmatprep.subr.mxu0 0.0
        %991 = vmatpush1.msra.mxu0 0.0
        %992 = vmatprep.subr.mxu0 0.0
        %993 = vmatpush1.msra.mxu0 0.0
        %994 = vmatprep.subr.mxu0 0.0
        %995 = vmatpush1.msra.mxu0 0.0
        %996 = vmatprep.subr.mxu0 0.0
        %997 = vmatpush1.msra.mxu0 0.0
        %998 = vmatprep.subr.mxu0 0.0
        %999 = vmatpush1.msra.mxu0 0.0
        %1000 = vmatprep.subr.mxu0 0.0
        %1001 = vmatpush1.msra.mxu0 0.0
        %1002 = vmatprep.subr.mxu0 0.0
        %1003 = vmatpush1.msra.mxu0 0.0
        %1004 = vmatprep.subr.mxu0 0.0
        %1005 = vmatpush1.msra.mxu0 0.0
        %1006 = vmatprep.subr.mxu0 0.0
        %1007 = vmatpush1.msra.mxu0 0.0
        %1008 = vmatprep.subr.mxu0 0.0
        %1009 = vmatpush1.msra.mxu0 0.0
        %1010 = vmatprep.subr.mxu0 0.0
        %1011 = vmatpush1.msra.mxu0 0.0
        %1012 = vmatprep.subr.mxu0 0.0
        %1013 = vmatpush1.msra.mxu0 0.0
        %1014 = vmatprep.subr.mxu0 %v982
        %1015 = vmatpush1.msra.mxu0 %v980
        %1016 = vmatprep.subr.mxu0 0.0
        %1017 = vmatpush2.msra.mxu0 0.0
        %1018 = vmatprep.subr.mxu0 0.0
        %1019 = vmatpush2.msra.mxu0 0.0
        %1020 = vmatprep.subr.mxu0 0.0
        %1021 = vmatpush2.msra.mxu0 0.0
        %1022 = vmatprep.subr.mxu0 0.0
        %1023 = vmatpush2.msra.mxu0 0.0
        %1024 = vmatprep.subr.mxu0 0.0
        %1025 = vmatpush2.msra.mxu0 0.0
        %1026 = vmatprep.subr.mxu0 0.0
        %1027 = vmatpush2.msra.mxu0 0.0
        %1028 = vmatprep.subr.mxu0 0.0
        %1029 = vmatpush2.msra.mxu0 0.0
        %1030 = vmatprep.subr.mxu0 0.0
        %1031 = vmatpush2.msra.mxu0 0.0
        %1032 = vmatprep.subr.mxu0 0.0
        %1033 = vmatpush2.msra.mxu0 0.0
        %1034 = vmatprep.subr.mxu0 0.0
        %1035 = vmatpush2.msra.mxu0 0.0
        %1036 = vmatprep.subr.mxu0 0.0
        %1037 = vmatpush2.msra.mxu0 0.0
        %1038 = vmatprep.subr.mxu0 0.0
        %1039 = vmatpush2.msra.mxu0 0.0
        %1040 = vmatprep.subr.mxu0 0.0
        %1041 = vmatpush2.msra.mxu0 0.0
        %1042 = vmatprep.subr.mxu0 0.0
        %1043 = vmatpush2.msra.mxu0 0.0
        %1044 = vmatprep.subr.mxu0 0.0
        %1045 = vmatpush2.msra.mxu0 0.0
        %1046 = vmatprep.subr.mxu0 0.0
        %1047 = vmatpush2.msra.mxu0 0.0
        %1048 = vmatprep.mubr.f32.mxu0 0.0
        %1049 = vmatmul.mubr.f32.gmra.mxu0 %v978
        %v1050 = vpop.f32.mrf.mxu0
        %v1051 = vadd.f32 0.0, %v1050
        %v1052 = vpop.f32.mrf.mxu0
        %v1053 = vadd.f32 0.0, %v1052
        %1054 = vdwg.mxu0
        %v1055 = vadd.f32 %v959, %v1051
        %v1056 = vadd.f32 %v960, %v1053
        %v1057 = vld [vmem:[#allocation2] sm:$0xff]
        %v1058 = vld [vmem:[#allocation2 + $0x8] sm:$0xf]
        %1059 = vrot.lane.b32.xlu0 %v446, 34
        %v1060 = vpop.permute.xlu0 %1059
        %v1061 = vrot.slane %v1060, 4
        %vm1062 = vcmask 277504
        %v1063 = vsel %vm1062, %v1061, %v1060
        %v1066 = vmul.f32 %v1057, %v1063
        %v1067 = vmul.f32 %v1058, %v1061
        %s1068 = scalar_lea.vmem %s1, 64
        %v1069 = vld [vmem:[%s1068] sm:$0xff]
        %v1072 = vcombine.high %v1066, %v1066
        %1073 = vrot.lane.b32.xlu0 %v1066, 94
        %v1074 = vpop.permute.xlu0 %1073
        %1075 = vrot.lane.b32.xlu0 %v1072, 94
        %v1076 = vpop.permute.xlu0 %1075
        %1077 = vrot.lane.b32.xlu0 %v1067, 94
        %v1078 = vpop.permute.xlu0 %1077
        %vm1079 = vcmask 769024
        %v1080 = vsel %vm1079, %v1074, %v1076
        %v1081 = vsel %vm1079, %v1076, %v1078
        %v1083 = vsel %vm273, %v1069, 0
        %v1085 = vsel %vm277, %v1080, 0
        %v1087 = vsel %vm277, %v1081, 0
        %1089 = vmatprep.subr.mxu0 0.0
        %1090 = vmatpush1.msra.mxu0 0.0
        %1091 = vmatprep.subr.mxu0 0.0
        %1092 = vmatpush1.msra.mxu0 0.0
        %1093 = vmatprep.subr.mxu0 0.0
        %1094 = vmatpush1.msra.mxu0 0.0
        %1095 = vmatprep.subr.mxu0 0.0
        %1096 = vmatpush1.msra.mxu0 0.0
        %1097 = vmatprep.subr.mxu0 0.0
        %1098 = vmatpush1.msra.mxu0 0.0
        %1099 = vmatprep.subr.mxu0 0.0
        %1100 = vmatpush1.msra.mxu0 0.0
        %1101 = vmatprep.subr.mxu0 0.0
        %1102 = vmatpush1.msra.mxu0 0.0
        %1103 = vmatprep.subr.mxu0 0.0
        %1104 = vmatpush1.msra.mxu0 0.0
        %1105 = vmatprep.subr.mxu0 0.0
        %1106 = vmatpush1.msra.mxu0 0.0
        %1107 = vmatprep.subr.mxu0 0.0
        %1108 = vmatpush1.msra.mxu0 0.0
        %1109 = vmatprep.subr.mxu0 0.0
        %1110 = vmatpush1.msra.mxu0 0.0
        %1111 = vmatprep.subr.mxu0 0.0
        %1112 = vmatpush1.msra.mxu0 0.0
        %1113 = vmatprep.subr.mxu0 0.0
        %1114 = vmatpush1.msra.mxu0 0.0
        %1115 = vmatprep.subr.mxu0 0.0
        %1116 = vmatpush1.msra.mxu0 0.0
        %1117 = vmatprep.subr.mxu0 0.0
        %1118 = vmatpush1.msra.mxu0 0.0
        %1119 = vmatprep.subr.mxu0 %v1087
        %1120 = vmatpush1.msra.mxu0 %v1085
        %1121 = vmatprep.subr.mxu0 0.0
        %1122 = vmatpush2.msra.mxu0 0.0
        %1123 = vmatprep.subr.mxu0 0.0
        %1124 = vmatpush2.msra.mxu0 0.0
        %1125 = vmatprep.subr.mxu0 0.0
        %1126 = vmatpush2.msra.mxu0 0.0
        %1127 = vmatprep.subr.mxu0 0.0
        %1128 = vmatpush2.msra.mxu0 0.0
        %1129 = vmatprep.subr.mxu0 0.0
        %1130 = vmatpush2.msra.mxu0 0.0
        %1131 = vmatprep.subr.mxu0 0.0
        %1132 = vmatpush2.msra.mxu0 0.0
        %1133 = vmatprep.subr.mxu0 0.0
        %1134 = vmatpush2.msra.mxu0 0.0
        %1135 = vmatprep.subr.mxu0 0.0
        %1136 = vmatpush2.msra.mxu0 0.0
        %1137 = vmatprep.subr.mxu0 0.0
        %1138 = vmatpush2.msra.mxu0 0.0
        %1139 = vmatprep.subr.mxu0 0.0
        %1140 = vmatpush2.msra.mxu0 0.0
        %1141 = vmatprep.subr.mxu0 0.0
        %1142 = vmatpush2.msra.mxu0 0.0
        %1143 = vmatprep.subr.mxu0 0.0
        %1144 = vmatpush2.msra.mxu0 0.0
        %1145 = vmatprep.subr.mxu0 0.0
        %1146 = vmatpush2.msra.mxu0 0.0
        %1147 = vmatprep.subr.mxu0 0.0
        %1148 = vmatpush2.msra.mxu0 0.0
        %1149 = vmatprep.subr.mxu0 0.0
        %1150 = vmatpush2.msra.mxu0 0.0
        %1151 = vmatprep.subr.mxu0 0.0
        %1152 = vmatpush2.msra.mxu0 0.0
        %1153 = vmatprep.mubr.f32.mxu0 0.0
        %1154 = vmatmul.mubr.f32.gmra.mxu0 %v1083
        %v1155 = vpop.f32.mrf.mxu0
        %v1156 = vadd.f32 0.0, %v1155
        %v1157 = vpop.f32.mrf.mxu0
        %v1158 = vadd.f32 0.0, %v1157
        %1159 = vdwg.mxu0
        %v1160 = vadd.f32 %v1055, %v1156
        %v1161 = vadd.f32 %v1056, %v1158
        %v1162 = vadd.f32 %v1160, %v1161
        %1163 = vadd.xlane.f32.xlu0 %v1162
        %v1164 = vpop.xlane.xlu0 %1163
        %v1165 = vmul.f32 %v1164, 0.00390625
        %v1166 = vsub.f32 %v1160, %v1165
        %v1167 = vsub.f32 %v1161, %v1165
        %v1168 = vmul.f32 %v1166, %v1166
        %v1169 = vmul.f32 %v1167, %v1167
        %v1170 = vadd.f32 %v1168, %v1169
        %1171 = vadd.xlane.f32.xlu0 %v1170
        %v1172 = vpop.xlane.xlu0 %1171
        %v1173 = vmul.f32 %v1172, 0.00390625
        %v1174 = vadd.f32 %v1173, 1e-05
        %v1175 = vrsqrt.pop %v1174
        %v1176 = vmul.f32 %v1166, %v1175
        %v1177 = vmul.f32 %v1167, %v1175
        %1179 = vset.pattern.permute.xlu0 0
        %1180 = vperm.xlu0 %1179, %v226
        %v1181 = vpop.permute.xlu0 %1180
        %v1183 = vmul.f32 %v1176, %v1181
        %v1184 = vmul.f32 %v1177, %v1181
        %1186 = vset.pattern.permute.xlu0 0
        %1187 = vperm.xlu0 %1186, %v227
        %v1188 = vpop.permute.xlu0 %1187
        %v1190 = vadd.f32 %v1183, %v1188
        %v1191 = vadd.f32 %v1184, %v1188
        %v1192 = vmul.f32 %v1190, 0.01
        %v1193 = vmul.f32 %v1191, 0.01
        %v1194 = vmax.f32 %v1190, %v1192
        %v1195 = vmax.f32 %v1191, %v1193
        %1196 = vst [vmem:[%s217] sm:$0xff] %v1194
        %1197 = vst [vmem:[%s217 + $0x8] sm:$0xff] %v1195
        %s1198 = sand.u32 %s137, 1
        %s1199 = scalar_lea.sflag [#allocation4], %s1198
        %s1200 = sand.u32 %s137, 1
        %s1201 = smul.addr %s1200, 16
        %s1202 = scalar_lea.vmem [#allocation3], %s1201
        // Predicated region
        $region41: #{tpu_custom_call.1} parent=39 // pred_check
          %p1203 = pneg %p147
        $region42: #{tpu_custom_call.1} parent=39 // pred_check_branch
          %1205 = sbr.rel (%p1203) target = $region44
        $region43: #{tpu_custom_call.1} parent=39 // pred_region
          %s1207 = ssub.s32 256, 256
          %1208 = vsyncadd %s1199, %s1207
          %s1209 = smul.addr %s19, 2
          %s1210 = smul.addr %s1209, 128
          %s1211 = scalar_lea.hbm %s5, %s1210
          %s1213 = sshll.u32 %s1202, 4
          %s1214 = int_to_ptr.vmem [resolvable:$true] %s1213
          %1216 = dma.vmem_to_hbm [thread:$0]  %s1214, 256, %s1211, %s1199
        $region44: #{tpu_custom_call.1} parent=39 // pred_fallthru
          _
      $region40: #{tpu_custom_call.1} parent=5 // pred_fallthru
        _
      %p1217 = scmp.le.s32.totalorder 2, %s14
      // Predicated region
      $region45: #{tpu_custom_call.1} parent=5 // pred_check
        %p1218 = pneg %p1217
      $region46: #{tpu_custom_call.1} parent=5 // pred_check_branch
        %1220 = sbr.rel (%p1218) target = $region48
      $region47: #{tpu_custom_call.1} parent=5 // pred_region
        %s1221 = ssub.s32 %s14, 2
        // Predicated region
        $region49: #{tpu_custom_call.1} parent=47 // pred_check
          %p1222 = pneg %p153
        $region50: #{tpu_custom_call.1} parent=47 // pred_check_branch
          %1224 = sbr.rel (%p1222) target = $region52
        $region51: #{tpu_custom_call.1} parent=47 // pred_region
          %s1225 = sand.u32 %s138, 1
          %s1226 = scalar_lea.sflag [#allocation4], %s1225
          %s1227 = sand.u32 %s138, 1
          %s1228 = smul.addr %s1227, 16
          %s1229 = scalar_lea.vmem [#allocation3], %s1228
          %1230 = dma.done %s1226, 256
        $region52: #{tpu_custom_call.1} parent=47 // pred_fallthru
          _
      $region48: #{tpu_custom_call.1} parent=5 // pred_fallthru
        _
    $region6: #{tpu_custom_call.1} parent=1 // loop_footer
      %s18 = sadd.s32 1, %s14
    $region7: #{tpu_custom_call.1} parent=1 // loop_footer_branch
      %13 = sbr.rel target = $region3
    $region8: #{tpu_custom_call.1} parent=1 // loop_exit
      _
    %1231 = vsyncpa [#allocation4], 1
    %s1232 = scalar_lea.sflag [#allocation4], 1
    %1233 = vsyncpa %s1232, 1

</llo_original>
